<compile_context>
chip_gen: v7x
topology: tpu7x:2x2x1
jax: 0.10.0
libtpu: 0.0.40
codegen_flags: <defaults>
</compile_context>

<pallas_src>
import functools

import jax
import jax.numpy as jnp
from jax.experimental import pallas as pl
from jax.experimental.pallas import tpu as pltpu


def _layerscale_kernel(x_ref, g_ref, o_ref, *, compute_dtype):
    # x_ref: (tile_r, tile_d); g_ref: (1, tile_d) broadcasts over rows on the VPU.
    x = x_ref[...].astype(compute_dtype)
    g = g_ref[...].astype(compute_dtype)
    o_ref[...] = (x * g).astype(o_ref.dtype)


def _sublane_multiple(dtype) -> int:
    # f32 -> 8, bf16/f16 -> 16, int8/fp8 -> 32 (sub-32-bit packs along sublanes).
    return {4: 8, 2: 16, 1: 32}.get(jnp.dtype(dtype).itemsize, 8)


def _block_bytes_for_chip() -> int:
    """Per-input-block byte budget, keyed on TPU generation."""
    try:
        kind = jax.devices()[0].device_kind.lower()
    except Exception:  # no device / odd backend: fall back to the safe default
        return 2 * 1024 * 1024
    if "v7" in kind:
        # ~3.2 TB/s per TC: a 2 MiB step is ~1.3 us, so 0.35 us overhead ~25%.
        # 8 MiB blocks cut that to <5%; pipelined footprint (~2 bufs x (in+out))
        # is ~32 MiB, under the 48 MiB vmem limit and 64 MiB physical VMEM.
        return 8 * 1024 * 1024
    if "v6" in kind:
        return 4 * 1024 * 1024
    return 2 * 1024 * 1024  # v5e and older: overhead already ~7% at 2 MiB


def _choose_tiles(R, D, itemsize, sub, block_bytes):
    """Byte-budgeted, layout-legal (tile_r, tile_d)."""
    LANE = 128

    # Split D only when it is lane-aligned and even a single sublane group of
    # full rows would exceed the budget; otherwise keep D whole (required when
    # D is not a multiple of 128).  Balance the split so the last block is not
    # a tiny ragged remainder.
    if D % LANE == 0 and D * itemsize * sub > block_bytes:
        n_j = pl.cdiv(D * itemsize * sub, block_bytes)
        tile_d = min(D, pl.cdiv(pl.cdiv(D, n_j), LANE) * LANE)
    else:
        tile_d = D

    rows_budget = max(1, block_bytes // (tile_d * itemsize))
    if rows_budget >= R:
        tile_r = R
    else:
        tile_r = max(sub, (rows_budget // sub) * sub)

    # Megacore: v7x has 2 TensorCores -- make sure there are >=2 (even) blocks
    # when the whole array would otherwise be a single block and a legal
    # (multiple-of-sublane) split exists.
    if pl.cdiv(R, tile_r) == 1 and pl.cdiv(D, tile_d) == 1 and R > sub:
        tile_r = max(sub, pl.cdiv(pl.cdiv(R, 2), sub) * sub)

    return tile_r, tile_d


def layer_scale(x: jax.Array, gamma: jax.Array, *, out_dtype=None) -> jax.Array:
    """out = x * gamma with gamma broadcast along the last axis of x.

    out_dtype defaults to x.dtype (bandwidth win when x is bf16 and gamma f32;
    matches timm-under-autocast usage).  Pass
    out_dtype=jnp.promote_types(x.dtype, gamma.dtype) for strict torch promotion.
    """
    assert x.shape[-1] == gamma.shape[0], (x.shape, gamma.shape)
    orig_shape = x.shape
    out_dtype = jnp.dtype(x.dtype if out_dtype is None else out_dtype)

    D = x.shape[-1]
    x2d = x.reshape(-1, D)
    R = x2d.shape[0]
    gamma2d = gamma.reshape(1, D)

    itemsize = jnp.dtype(x.dtype).itemsize
    sub = _sublane_multiple(x.dtype)
    block_bytes = _block_bytes_for_chip()
    tile_r, tile_d = _choose_tiles(R, D, itemsize, sub, block_bytes)

    # D-blocks outermost, row-blocks innermost: gamma's block index (0, j) is
    # constant across the inner axis, so Pallas does not re-DMA it per step.
    grid = (pl.cdiv(D, tile_d), pl.cdiv(R, tile_r))

    # Compute dtype: stay native when everything is the same sub-32-bit dtype
    # (bf16 VPU on v6e/v7x; on v5e the compiler inserts the cast, still correct);
    # otherwise go through f32.
    if (jnp.dtype(x.dtype) == jnp.dtype(gamma.dtype) == out_dtype
            and out_dtype != jnp.dtype(jnp.float32)):
        compute_dtype = out_dtype
    else:
        compute_dtype = jnp.float32

    cost = pl.CostEstimate(
        flops=R * D,
        transcendentals=0,
        bytes_accessed=(
            R * D * itemsize                            # read x
            + R * D * out_dtype.itemsize                # write out
            + D * jnp.dtype(gamma.dtype).itemsize       # read gamma once (resident)
        ),
    )

    out2d = pl.pallas_call(
        functools.partial(_layerscale_kernel, compute_dtype=compute_dtype),
        out_shape=jax.ShapeDtypeStruct((R, D), out_dtype),
        grid_spec=pltpu.PrefetchScalarGridSpec(
            num_scalar_prefetch=0,
            grid=grid,
            in_specs=[
                pl.BlockSpec((tile_r, tile_d), lambda j, i: (i, j)),
                pl.BlockSpec((1, tile_d), lambda j, i: (0, j)),
            ],
            out_specs=pl.BlockSpec((tile_r, tile_d), lambda j, i: (i, j)),
        ),
        compiler_params=pltpu.CompilerParams(
            dimension_semantics=("parallel", "parallel"),
            # Pipelined footprint is ~2 bufs x (in + out) x block_bytes
            # (<= 32 MiB at the 8 MiB v7x budget) plus gamma; 48 MiB leaves
            # headroom while staying under v7x's 64 MiB physical VMEM.
            vmem_limit_bytes=48 * 1024 * 1024,
        ),
        cost_estimate=cost,
    )(x2d, gamma2d)

    return out2d.reshape(orig_shape)


if __name__ == "__main__":
    key = jax.random.PRNGKey(0)

    # Small shapes consistent with transformer-token usage: (B, S, D)
    B, S, D = 2, 8, 32
    init_values = 1e-5

    kx, _ = jax.random.split(key)
    x = jax.random.normal(kx, (B, S, D), dtype=jnp.float32)

    # Deterministic parameter init, matching nn.Parameter(init_values * ones(dim)).
    gamma = init_values * jnp.ones((D,), dtype=jnp.float32)

    out = layer_scale(x, gamma)
    out = jax.block_until_ready(out)

    # Reference check (plain JAX broadcast multiply).
    ref = x * gamma
    assert out.shape == x.shape
    assert out.dtype == ref.dtype
    assert jnp.allclose(out, ref, atol=1e-6, rtol=1e-6)

    print("KERNEL_OK")
</pallas_src>

<mosaic_0001>
module attributes {stable_mosaic.version = 11 : i64} {
  func.func @_layerscale_kernel(%arg0: i32, %arg1: i32, %arg2: memref<8x32xf32, #tpu.memory_space<vmem>>, %arg3: memref<1x32xf32, #tpu.memory_space<vmem>>, %arg4: memref<8x32xf32, #tpu.memory_space<vmem>>) attributes {dimension_semantics = [#tpu.dimension_semantics<parallel>, #tpu.dimension_semantics<parallel>], iteration_bounds = array<i64: 1, 2>, scalar_prefetch = 0 : i64, scratch_operands = 0 : i64, tpu.core_type = #tpu.core_type<tc>, window_params = [{transform_indices = @transform_0, window_bounds = array<i64: 8, 32>}, {transform_indices = @transform_1, window_bounds = array<i64: 1, 32>}, {transform_indices = @transform_2, window_bounds = array<i64: 8, 32>}]} {
    %c0 = arith.constant 0 : index
    %c0_0 = arith.constant 0 : index
    %0 = vector.load %arg2[%c0, %c0_0] : memref<8x32xf32, #tpu.memory_space<vmem>>, vector<8x32xf32>
    %c0_1 = arith.constant 0 : index
    %c0_2 = arith.constant 0 : index
    %1 = vector.load %arg3[%c0_1, %c0_2] : memref<1x32xf32, #tpu.memory_space<vmem>>, vector<1x32xf32>
    %2 = vector.broadcast %1 : vector<1x32xf32> to vector<8x32xf32>
    %3 = arith.mulf %0, %2 : vector<8x32xf32>
    %c0_3 = arith.constant 0 : index
    %c0_4 = arith.constant 0 : index
    %4 = vector.load %arg4[%c0_3, %c0_4] : memref<8x32xf32, #tpu.memory_space<vmem>>, vector<8x32xf32>
    tpu.vector_store %arg4[%c0_3, %c0_4], %3 {strides = array<i32>} : memref<8x32xf32, #tpu.memory_space<vmem>>, vector<8x32xf32>,
    return
  }
  func.func @transform_0(%arg0: i32, %arg1: i32) -> (i32, i32) {
    %c0_i32 = arith.constant 0 : i32
    return %arg1, %arg0 : i32, i32
  }
  func.func @transform_1(%arg0: i32, %arg1: i32) -> (i32, i32) {
    %c0_i32 = arith.constant 0 : i32
    %c0_i32_0 = arith.constant 0 : i32
    return %c0_i32, %arg0 : i32, i32
  }
  func.func @transform_2(%arg0: i32, %arg1: i32) -> (i32, i32) {
    %c0_i32 = arith.constant 0 : i32
    return %arg1, %arg0 : i32, i32
  }
}

</mosaic_0001>

<llo_original>
// kernel: tpu_custom_call.1
$region0: #{tpu_custom_call.1}
  #allocation0 [shape = 'u32[]', space=smem, size = 0x4, offset = 0x4, fixed_abs, tag = 'smem constant byte address 0x4 - core index']
  #allocation1 [shape = 'u32[144,128]{1,0:T(1,128)}', space=vmem, size = 0x12000, scoped, tag = 'internal scratch']
  %s0 = inlined_call_operand.hbm [shape: f32[16,32], index: 0, kind: input, shape index: {}]
  %s1 = inlined_call_operand.vmem [shape: f32[1,32], index: 1, kind: input, shape index: {}]
  %s2 = inlined_call_operand.hbm [shape: f32[16,32], index: 2, kind: output, shape index: {}]
  %s3 = sld [smem:[#allocation0]]
  $region45: #{tpu_custom_call.1} parent=0
    _
  %s5 = ssub.s32 1, %s3
  %s6 = scalar_select 0, %s5, %s3
  $region1: #{tpu_custom_call.1} parent=0
    #allocation2 [shape = 'u8[8192]{0}', space=vmem, size = 0x2000, scoped, tag = 'input window, operand 0']
    #allocation3 [shape = 's32[2]{0}', space=sflag, size = 0x8, scoped, tag = 'scoped memory for tpu_custom_call.1']
    #allocation4 [shape = 's32[2]{0}', space=sflag, size = 0x8, scoped, tag = 'scoped memory for tpu_custom_call.1']
    #allocation5 [shape = 'u8[8192]{0}', space=vmem, size = 0x2000, scoped, tag = 'output window, operand 0']
    %7 = vsyncpa [#allocation3], 0
    %s8 = scalar_lea.sflag [#allocation3], 1
    %9 = vsyncpa %s8, 0
    %10 = vsyncpa [#allocation4], 0
    %s11 = scalar_lea.sflag [#allocation4], 1
    %12 = vsyncpa %s11, 0
    loop: start=0, step=1, limit=4
    $region2: #{tpu_custom_call.1} parent=1 // loop_pre_header
      _
    $region3: #{tpu_custom_call.1} parent=1 // loop_header
      %s14 = sphi 0, %s18
      %p15 = scmp.ge.s32.totalorder %s14, 4
      %s21 = sphi 0, %s33
      %s22 = sphi 0, %s29
      %s23 = sphi 0, %s21
      %s24 = sphi 0, %s22
      %s25 = sphi 0, %s23
      %s26 = sphi 0, %s24
      %s38 = sphi 0, %s40
      %s41 = sphi 0, %s38
      %s42 = sphi 0, %s41
      %s58 = sphi 0, %s42
      %s64 = sphi 0, %s66
      %s67 = sphi 0, %s64
      %s68 = sphi 0, %s67
      %s84 = sphi 0, %s68
      %s92 = sphi 0, %s94
      %s95 = sphi 0, %s92
      %s96 = sphi 0, %s95
      %s112 = sphi 0, %s96
    $region4: #{tpu_custom_call.1} parent=1 // loop_header_branch
      %17 = sbr.rel (%p15) target = $region8
    $region5: #{tpu_custom_call.1} parent=1 // loop_body
      %s19 = ssub.s32 %s14, 1
      %s20 = ssub.s32 %s14, 2
      %s27 = sadd.s32 1, %s22
      %p28 = scmp.ge.s32.totalorder %s27, 2
      %s29 = scalar_select %p28, 0, %s27
      %s30 = sadd.s32 1, %s21
      %s31 = scalar_select %p28, %s30, %s21
      %p32 = scmp.ge.s32.totalorder %s31, 1
      %s33 = scalar_select %p32, 0, %s31
      %s34 = ssub.s32 %s22, %s29
      %s35 = ssub.s32 %s21, %s33
      %s36 = sor.u32 %s34, %s35
      %p37 = scmp.eq.s32.totalorder %s36, 0
      %s39 = sadd.s32 %s38, 1
      %s40 = scalar_select %p37, %s38, %s39
      %p43 = pneg %p37
      %p44 = scmp.eq.s32.totalorder %s14, 1
      %p45 = por %p43, %p44
      %p46 = scmp.ne.s32.totalorder %s38, %s41
      %p47 = scmp.eq.s32.totalorder %s14, 0
      %p48 = por %p46, %p47
      %p49 = scmp.ne.s32.totalorder %s38, %s41
      %p50 = scmp.eq.s32.totalorder %s19, 1
      %p51 = por %p49, %p50
      %p52 = scmp.ne.s32.totalorder %s41, %s42
      %p53 = scmp.eq.s32.totalorder %s19, 0
      %p54 = por %p52, %p53
      %p55 = scmp.ne.s32.totalorder %s41, %s42
      %p56 = scmp.eq.s32.totalorder %s20, 1
      %p57 = por %p55, %p56
      %p59 = scmp.ne.s32.totalorder %s42, %s58
      %p60 = scmp.eq.s32.totalorder %s20, 0
      %p61 = por %p59, %p60
      %s62 = ssub.s32 %s21, %s33
      %p63 = scmp.eq.s32.totalorder %s62, 0
      %s65 = sadd.s32 %s64, 1
      %s66 = scalar_select %p63, %s64, %s65
      %p69 = pneg %p63
      %p70 = scmp.eq.s32.totalorder %s14, 1
      %p71 = por %p69, %p70
      %p72 = scmp.ne.s32.totalorder %s64, %s67
      %p73 = scmp.eq.s32.totalorder %s14, 0
      %p74 = por %p72, %p73
      %p75 = scmp.ne.s32.totalorder %s64, %s67
      %p76 = scmp.eq.s32.totalorder %s19, 1
      %p77 = por %p75, %p76
      %p78 = scmp.ne.s32.totalorder %s67, %s68
      %p79 = scmp.eq.s32.totalorder %s19, 0
      %p80 = por %p78, %p79
      %p81 = scmp.ne.s32.totalorder %s67, %s68
      %p82 = scmp.eq.s32.totalorder %s20, 1
      %p83 = por %p81, %p82
      %p85 = scmp.ne.s32.totalorder %s68, %s84
      %p86 = scmp.eq.s32.totalorder %s20, 0
      %p87 = por %p85, %p86
      %s88 = ssub.s32 %s22, %s29
      %s89 = ssub.s32 %s21, %s33
      %s90 = sor.u32 %s88, %s89
      %p91 = scmp.eq.s32.totalorder %s90, 0
      %s93 = sadd.s32 %s92, 1
      %s94 = scalar_select %p91, %s92, %s93
      %p97 = pneg %p91
      %p98 = scmp.eq.s32.totalorder %s14, 1
      %p99 = por %p97, %p98
      %p100 = scmp.ne.s32.totalorder %s92, %s95
      %p101 = scmp.eq.s32.totalorder %s14, 0
      %p102 = por %p100, %p101
      %p103 = scmp.ne.s32.totalorder %s92, %s95
      %p104 = scmp.eq.s32.totalorder %s19, 1
      %p105 = por %p103, %p104
      %p106 = scmp.ne.s32.totalorder %s95, %s96
      %p107 = scmp.eq.s32.totalorder %s19, 0
      %p108 = por %p106, %p107
      %p109 = scmp.ne.s32.totalorder %s95, %s96
      %p110 = scmp.eq.s32.totalorder %s20, 1
      %p111 = por %p109, %p110
      %p113 = scmp.ne.s32.totalorder %s96, %s112
      %p114 = scmp.eq.s32.totalorder %s20, 0
      %p115 = por %p113, %p114
      %p116 = scmp.le.s32.totalorder 1, %s14
      %p117 = scmp.lt.s32.totalorder %s14, 3
      %p118 = pnand %p116, %p117
      %p119 = pneg %p118
      // Predicated region
      $region9: #{tpu_custom_call.1} parent=5 // pred_check
        _
      $region10: #{tpu_custom_call.1} parent=5 // pred_check_branch
        %121 = sbr.rel (%p118) target = $region12
      $region11: #{tpu_custom_call.1} parent=5 // pred_region
        %s122 = ssub.s32 %s14, 1
        // Predicated region
        $region13: #{tpu_custom_call.1} parent=11 // pred_check
          %p123 = pneg %p80
        $region14: #{tpu_custom_call.1} parent=11 // pred_check_branch
          %125 = sbr.rel (%p123) target = $region16
        $region15: #{tpu_custom_call.1} parent=11 // pred_region
          %p126 = scmp.lt.s32.totalorder %s23, 0
          %s127 = scalar_select %p126, %s23, 0
          %s128 = scalar_lea.vmem %s1, %s127
        $region16: #{tpu_custom_call.1} parent=11 // pred_fallthru
          _
      $region12: #{tpu_custom_call.1} parent=5 // pred_fallthru
        _
      %p129 = scmp.lt.s32.totalorder %s14, 2
      // Predicated region
      $region17: #{tpu_custom_call.1} parent=5 // pred_check
        %p130 = pneg %p129
      $region18: #{tpu_custom_call.1} parent=5 // pred_check_branch
        %132 = sbr.rel (%p130) target = $region20
      $region19: #{tpu_custom_call.1} parent=5 // pred_region
        // Predicated region
        $region21: #{tpu_custom_call.1} parent=19 // pred_check
          %p133 = pneg %p48
        $region22: #{tpu_custom_call.1} parent=19 // pred_check_branch
          %135 = sbr.rel (%p133) target = $region24
        $region23: #{tpu_custom_call.1} parent=19 // pred_region
          %s136 = sand.u32 %s38, 1
          %s137 = scalar_lea.sflag [#allocation3], %s136
          %s138 = sand.u32 %s38, 1
          %s139 = smul.addr %s138, 8
          %s140 = scalar_lea.vmem [#allocation2], %s139
          %s142 = ssub.s32 128, 128
          %143 = vsyncadd %s137, %s142
          %s144 = sadd.s32 %s21, %s22
          %s145 = smul.addr %s144, 128
          %s146 = scalar_lea.hbm %s0, %s145
          %s148 = sshll.u32 %s140, 4
          %s149 = int_to_ptr.vmem [resolvable:$true] %s148
          %151 = dma.hbm_to_vmem [thread:$0]  %s146, 128, %s149, %s137
        $region24: #{tpu_custom_call.1} parent=19 // pred_fallthru
          _
      $region20: #{tpu_custom_call.1} parent=5 // pred_fallthru
        _
      %p152 = scmp.le.s32.totalorder 1, %s14
      %p153 = scmp.lt.s32.totalorder %s14, 3
      %p154 = pnand %p152, %p153
      %p155 = pneg %p154
      // Predicated region
      $region25: #{tpu_custom_call.1} parent=5 // pred_check
        _
      $region26: #{tpu_custom_call.1} parent=5 // pred_check_branch
        %157 = sbr.rel (%p154) target = $region28
      $region27: #{tpu_custom_call.1} parent=5 // pred_region
        %s158 = ssub.s32 %s14, 1
        %s159 = sand.u32 %s41, 1
        %s160 = scalar_lea.sflag [#allocation3], %s159
        %s161 = sand.u32 %s41, 1
        %s162 = smul.addr %s161, 8
        %s163 = scalar_lea.vmem [#allocation2], %s162
        // Predicated region
        $region29: #{tpu_custom_call.1} parent=27 // pred_check
          %p164 = pneg %p54
        $region30: #{tpu_custom_call.1} parent=27 // pred_check_branch
          %166 = sbr.rel (%p164) target = $region32
        $region31: #{tpu_custom_call.1} parent=27 // pred_region
          %167 = dma.done %s160, 128
        $region32: #{tpu_custom_call.1} parent=27 // pred_fallthru
          _
        %s168 = sand.u32 %s41, 1
        %s169 = scalar_lea.sflag [#allocation3], %s168
        %s170 = sand.u32 %s41, 1
        %s171 = smul.addr %s170, 8
        %s172 = scalar_lea.vmem [#allocation2], %s171
        %p173 = pneg %p54
        %p174 = pneg %p51
        %p175 = scmp.lt.s32.totalorder %s23, 0
        %s176 = scalar_select %p175, %s23, 0
        %s177 = scalar_lea.vmem %s1, %s176
        %p178 = pneg %p80
        %p179 = pneg %p77
        %p180 = pneg %p108
        %p181 = pneg %p105
        %s182 = sand.u32 %s95, 1
        %s183 = scalar_lea.sflag [#allocation4], %s182
        %s184 = sand.u32 %s95, 1
        %s185 = smul.addr %s184, 8
        %s186 = scalar_lea.vmem [#allocation5], %s185
        %p187 = scmp.lt.s32.totalorder %s23, 0
        %s188 = scalar_select %p187, %s23, 0
        %s189 = scalar_lea.vmem %s1, %s188
        %v190 = vld [vmem:[%s163] sm:$0xff]
        %v191 = vld [vmem:[%s189] sm:$0x1]
        %v193 = vlaneseq
        %v194 = vshrl.u32 %v193, 7
        %v195 = vsub.s32 0, %v194
        %v196 = vrot.slane %v191, %v195
        %v198 = vmul.f32 %v190, %v196
        %vm199 = vcmask 261120
        %200 = vst.msk [vmem:[%s186] sm:$0xff] %vm199, %v198
        %s201 = sand.u32 %s95, 1
        %s202 = scalar_lea.sflag [#allocation4], %s201
        %s203 = sand.u32 %s95, 1
        %s204 = smul.addr %s203, 8
        %s205 = scalar_lea.vmem [#allocation5], %s204
        // Predicated region
        $region33: #{tpu_custom_call.1} parent=27 // pred_check
          %p206 = pneg %p105
        $region34: #{tpu_custom_call.1} parent=27 // pred_check_branch
          %208 = sbr.rel (%p206) target = $region36
        $region35: #{tpu_custom_call.1} parent=27 // pred_region
          %s210 = ssub.s32 128, 128
          %211 = vsyncadd %s202, %s210
          %s212 = sadd.s32 %s23, %s24
          %s213 = smul.addr %s212, 128
          %s214 = scalar_lea.hbm %s2, %s213
          %s216 = sshll.u32 %s205, 4
          %s217 = int_to_ptr.vmem [resolvable:$true] %s216
          %219 = dma.vmem_to_hbm [thread:$0]  %s217, 128, %s214, %s202
        $region36: #{tpu_custom_call.1} parent=27 // pred_fallthru
          _
      $region28: #{tpu_custom_call.1} parent=5 // pred_fallthru
        _
      %p220 = scmp.le.s32.totalorder 2, %s14
      // Predicated region
      $region37: #{tpu_custom_call.1} parent=5 // pred_check
        %p221 = pneg %p220
      $region38: #{tpu_custom_call.1} parent=5 // pred_check_branch
        %223 = sbr.rel (%p221) target = $region40
      $region39: #{tpu_custom_call.1} parent=5 // pred_region
        %s224 = ssub.s32 %s14, 2
        // Predicated region
        $region41: #{tpu_custom_call.1} parent=39 // pred_check
          %p225 = pneg %p111
        $region42: #{tpu_custom_call.1} parent=39 // pred_check_branch
          %227 = sbr.rel (%p225) target = $region44
        $region43: #{tpu_custom_call.1} parent=39 // pred_region
          %s228 = sand.u32 %s96, 1
          %s229 = scalar_lea.sflag [#allocation4], %s228
          %s230 = sand.u32 %s96, 1
          %s231 = smul.addr %s230, 8
          %s232 = scalar_lea.vmem [#allocation5], %s231
          %233 = dma.done %s229, 128
        $region44: #{tpu_custom_call.1} parent=39 // pred_fallthru
          _
      $region40: #{tpu_custom_call.1} parent=5 // pred_fallthru
        _
    $region6: #{tpu_custom_call.1} parent=1 // loop_footer
      %s18 = sadd.s32 1, %s14
    $region7: #{tpu_custom_call.1} parent=1 // loop_footer_branch
      %13 = sbr.rel target = $region3
    $region8: #{tpu_custom_call.1} parent=1 // loop_exit
      _
    %234 = vsyncpa [#allocation3], 1
    %s235 = scalar_lea.sflag [#allocation3], 1
    %236 = vsyncpa %s235, 1
    %237 = vsyncpa [#allocation4], 1
    %s238 = scalar_lea.sflag [#allocation4], 1
    %239 = vsyncpa %s238, 1

</llo_original>
